<compile_context>
chip_gen: v5e
topology: v5e:2x2
jax: 0.10.0
libtpu: 0.0.40
codegen_flags: <defaults>
</compile_context>

<pallas_src>
from functools import partial

import jax
import jax.numpy as jnp
from jax.experimental import pallas as pl
from jax.experimental.pallas import tpu as pltpu


def lstm_classifier_kernel(x_ref, state_ref, gw_ref, head_ref, out_ref):
    T, NL = x_ref.shape
    H = state_ref.shape[1]
    G = 4 * H

    # Unpack the packed parameter slabs (static, 8-aligned sublane slices).
    gw = gw_ref[...]                         # (NL + H + 1, 4H)
    wih = gw[0:NL, :]                        # (NL, 4H)   == W_ih^T
    whh = gw[NL:NL + H, :]                   # (H, 4H)    == W_hh^T
    b = gw[NL + H:NL + H + 1, :]             # (1, 4H)    == b_ih + b_hh

    head = head_ref[...]                     # (H + 1, n_cat)
    wlin = head[0:H, :]                      # (H, n_cat) == W_lin^T
    blin = head[H:H + 1, :]                  # (1, n_cat)

    # Batched input projection off the recurrence critical path (bias folded):
    #   (T, NL) @ (NL, 4H) + (1, 4H) -> (T, 4H)
    x_proj = jnp.dot(x_ref[...], wih, preferred_element_type=jnp.float32) + b

    h = state_ref[0:1, :]                    # (1, H)
    c = state_ref[1:2, :]                    # (1, H)

    # Hoisted lane mask selecting the g-gate block [2H, 3H) of the gates vreg.
    lane = jax.lax.broadcasted_iota(jnp.int32, (1, G), 1)
    g_mask = jnp.logical_and(lane >= 2 * H, lane < 3 * H)

    def _sigmoid(z):
        # 1 exp + 1 approx reciprocal, both on the EUP slot.
        return pl.reciprocal(1.0 + jnp.exp(-z), approx=True)

    # T is a small static trip-count: fully unrolled, h/c stay in vregs.
    for t in range(T):
        gates = (jnp.dot(h, whh, preferred_element_type=jnp.float32)
                 + x_proj[t:t + 1, :])                 # (1, 4H), order [i,f,g,o]
        # Fused activations: sigmoid and tanh once on the full 4H-lane vreg,
        # then select tanh only for the g block.
        act = jnp.where(g_mask, jnp.tanh(gates), _sigmoid(gates))
        i_g = act[:, 0 * H:1 * H]
        f_g = act[:, 1 * H:2 * H]
        g_g = act[:, 2 * H:3 * H]
        o_g = act[:, 3 * H:4 * H]
        c = f_g * c + i_g * g_g
        h = o_g * jnp.tanh(c)

    # Classifier head on the last hidden state.
    out_ref[...] = (jnp.dot(h, wlin, preferred_element_type=jnp.float32)
                    + blin).astype(out_ref.dtype)


def prepare_params(w_ih, w_hh, b_ih, b_hh, w_lin, b_lin):
    """One-time parameter packing (do NOT run per forward call)."""
    H = w_hh.shape[1]
    gw = jnp.concatenate([
        jnp.asarray(w_ih, jnp.float32).T,                        # (NL, 4H)
        jnp.asarray(w_hh, jnp.float32).T,                        # (H, 4H)
        (b_ih + b_hh).reshape(1, 4 * H).astype(jnp.float32),     # (1, 4H)
    ], axis=0)
    head = jnp.concatenate([
        jnp.asarray(w_lin, jnp.float32).T,                       # (H, n_cat)
        jnp.asarray(b_lin, jnp.float32).reshape(1, -1),          # (1, n_cat)
    ], axis=0)
    return gw, head


@partial(jax.jit, static_argnames=("n_categories",))
def lstm_classifier_forward(x_seq, h0, c0, gw, head, n_categories=2):
    """x_seq: (T, 1, n_letters); returns logits (1, n_categories)."""
    T, _, NL = x_seq.shape
    H = h0.shape[-1]

    # Tiny per-call glue, fused by jit: lane-clean 2-D x slab + (h0;c0) slab.
    x2d = jnp.asarray(x_seq, jnp.float32).reshape(T, NL)
    state = jnp.concatenate(
        [h0.reshape(1, H), c0.reshape(1, H)], axis=0).astype(jnp.float32)

    return pl.pallas_call(
        lstm_classifier_kernel,
        out_shape=jax.ShapeDtypeStruct((1, n_categories), jnp.float32),
        in_specs=[
            pl.BlockSpec(memory_space=pltpu.MemorySpace.VMEM),   # x  (T, NL)
            pl.BlockSpec(memory_space=pltpu.MemorySpace.VMEM),   # state (2, H)
            pl.BlockSpec(memory_space=pltpu.MemorySpace.VMEM),   # gate slab
            pl.BlockSpec(memory_space=pltpu.MemorySpace.VMEM),   # head slab
        ],
        out_specs=pl.BlockSpec(memory_space=pltpu.MemorySpace.VMEM),
    )(x2d, state, gw, head)


def _reference_forward(x_seq, h0, c0, w_ih, w_hh, b_ih, b_hh, w_lin, b_lin):
    """Pure-JAX reference of the PyTorch forward (for validation)."""
    h = h0.reshape(1, -1)
    c = c0.reshape(1, -1)
    H = h.shape[-1]
    for t in range(x_seq.shape[0]):
        x_t = x_seq[t]                                  # (1, n_letters)
        gates = x_t @ w_ih.T + h @ w_hh.T + b_ih + b_hh
        i_g = jax.nn.sigmoid(gates[:, 0 * H:1 * H])
        f_g = jax.nn.sigmoid(gates[:, 1 * H:2 * H])
        g_g = jnp.tanh(gates[:, 2 * H:3 * H])
        o_g = jax.nn.sigmoid(gates[:, 3 * H:4 * H])
        c = f_g * c + i_g * g_g
        h = o_g * jnp.tanh(c)
    return h @ w_lin.T + b_lin


if __name__ == "__main__":
    # Small shapes consistent with the module: 1-layer LSTM, batch=1.
    seq_len = 8
    n_letters = 16
    hidden_sz = 32
    n_categories = 2

    key = jax.random.PRNGKey(0)
    keys = jax.random.split(key, 10)

    # Deterministic parameter init (PyTorch default: U(-1/sqrt(H), 1/sqrt(H))).
    bound = 1.0 / (hidden_sz ** 0.5)
    w_ih = jax.random.uniform(keys[0], (4 * hidden_sz, n_letters), jnp.float32, -bound, bound)
    w_hh = jax.random.uniform(keys[1], (4 * hidden_sz, hidden_sz), jnp.float32, -bound, bound)
    b_ih = jax.random.uniform(keys[2], (4 * hidden_sz,), jnp.float32, -bound, bound)
    b_hh = jax.random.uniform(keys[3], (4 * hidden_sz,), jnp.float32, -bound, bound)
    w_lin = jax.random.uniform(keys[4], (n_categories, hidden_sz), jnp.float32, -bound, bound)
    b_lin = jax.random.uniform(keys[5], (n_categories,), jnp.float32, -bound, bound)

    # The PyTorch forward draws hn/cn from torch.randn each call; here we draw
    # them once deterministically and pass them in.
    h0 = jax.random.normal(keys[6], (1, 1, hidden_sz), jnp.float32)
    c0 = jax.random.normal(keys[7], (1, 1, hidden_sz), jnp.float32)

    # Input: (seq_len, batch=1, n_letters), e.g. one-hot-ish letter encodings.
    x = jax.random.normal(keys[8], (seq_len, 1, n_letters), jnp.float32)

    # One-time parameter packing (transposes / bias fold hoisted off per-call path).
    gw, head = prepare_params(w_ih, w_hh, b_ih, b_hh, w_lin, b_lin)
    gw, head = jax.block_until_ready((gw, head))

    logits = lstm_classifier_forward(x, h0, c0, gw, head, n_categories=n_categories)
    logits = jax.block_until_ready(logits)

    ref = _reference_forward(x, h0, c0, w_ih, w_hh, b_ih, b_hh, w_lin, b_lin)
    assert logits.shape == (1, n_categories)
    assert jnp.allclose(logits, ref, rtol=1e-2, atol=1e-2), (logits, ref)

    print("KERNEL_OK")
</pallas_src>

<mosaic_0001>
module attributes {stable_mosaic.version = 11 : i64} {
  func.func @lstm_classifier_kernel(%arg0: memref<8x16xf32, #tpu.memory_space<vmem>>, %arg1: memref<2x32xf32, #tpu.memory_space<vmem>>, %arg2: memref<49x128xf32, #tpu.memory_space<vmem>>, %arg3: memref<33x2xf32, #tpu.memory_space<vmem>>, %arg4: memref<1x2xf32, #tpu.memory_space<vmem>>) attributes {dimension_semantics = [], scalar_prefetch = 0 : i64, scratch_operands = 0 : i64, tpu.core_type = #tpu.core_type<tc>} {
    %c0 = arith.constant 0 : index
    %c0_0 = arith.constant 0 : index
    %0 = vector.load %arg2[%c0, %c0_0] : memref<49x128xf32, #tpu.memory_space<vmem>>, vector<49x128xf32>
    %1 = vector.extract_strided_slice %0 {offsets = [0, 0], sizes = [16, 128], strides = [1, 1]} : vector<49x128xf32> to vector<16x128xf32>
    %2 = vector.extract_strided_slice %0 {offsets = [16, 0], sizes = [32, 128], strides = [1, 1]} : vector<49x128xf32> to vector<32x128xf32>
    %3 = vector.extract_strided_slice %0 {offsets = [48, 0], sizes = [1, 128], strides = [1, 1]} : vector<49x128xf32> to vector<1x128xf32>
    %c0_1 = arith.constant 0 : index
    %c0_2 = arith.constant 0 : index
    %4 = vector.load %arg3[%c0_1, %c0_2] : memref<33x2xf32, #tpu.memory_space<vmem>>, vector<33x2xf32>
    %5 = vector.extract_strided_slice %4 {offsets = [0, 0], sizes = [32, 2], strides = [1, 1]} : vector<33x2xf32> to vector<32x2xf32>
    %6 = vector.extract_strided_slice %4 {offsets = [32, 0], sizes = [1, 2], strides = [1, 1]} : vector<33x2xf32> to vector<1x2xf32>
    %c0_3 = arith.constant 0 : index
    %c0_4 = arith.constant 0 : index
    %7 = vector.load %arg0[%c0_3, %c0_4] : memref<8x16xf32, #tpu.memory_space<vmem>>, vector<8x16xf32>
    %cst = arith.constant dense<0.000000e+00> : vector<8x128xf32>
    %8 = tpu.matmul %7, %1, %cst {dimension_numbers = #tpu.dot_dimension_numbers<[1], [0], [0], [1], [0, 0, 1, 1], [], []>} : vector<8x16xf32>, vector<16x128xf32>, vector<8x128xf32> -> vector<8x128xf32>
    %9 = vector.broadcast %3 : vector<1x128xf32> to vector<8x128xf32>
    %10 = arith.addf %8, %9 : vector<8x128xf32>
    %c0_5 = arith.constant 0 : index
    %c0_6 = arith.constant 0 : index
    %11 = vector.load %arg1[%c0_5, %c0_6] : memref<2x32xf32, #tpu.memory_space<vmem>>, vector<1x32xf32>
    %c1 = arith.constant 1 : index
    %c0_7 = arith.constant 0 : index
    %12 = vector.load %arg1[%c1, %c0_7] : memref<2x32xf32, #tpu.memory_space<vmem>>, vector<1x32xf32>
    %13 = tpu.iota {dimensions = array<i32: 1>} : vector<1x128xi32>
    %c64_i32 = arith.constant 64 : i32
    %14 = vector.broadcast %c64_i32 : i32 to vector<1x128xi32>
    %15 = arith.cmpi sge, %13, %14 : vector<1x128xi32>
    %c96_i32 = arith.constant 96 : i32
    %16 = vector.broadcast %c96_i32 : i32 to vector<1x128xi32>
    %17 = arith.cmpi slt, %13, %16 : vector<1x128xi32>
    %18 = arith.andi %15, %17 : vector<1x128xi1>
    %cst_8 = arith.constant dense<0.000000e+00> : vector<1x128xf32>
    %19 = tpu.matmul %11, %2, %cst_8 {dimension_numbers = #tpu.dot_dimension_numbers<[1], [0], [0], [1], [0, 0, 1, 1], [], []>} : vector<1x32xf32>, vector<32x128xf32>, vector<1x128xf32> -> vector<1x128xf32>
    %20 = vector.extract_strided_slice %10 {offsets = [0, 0], sizes = [1, 128], strides = [1, 1]} : vector<8x128xf32> to vector<1x128xf32>
    %21 = arith.addf %19, %20 : vector<1x128xf32>
    %22 = math.tanh %21 : vector<1x128xf32>
    %cst_9 = arith.constant 0.000000e+00 : f32
    %23 = vector.broadcast %cst_9 : f32 to vector<1x128xf32>
    %24 = arith.subf %23, %21 : vector<1x128xf32>
    %25 = math.exp %24 : vector<1x128xf32>
    %cst_10 = arith.constant 1.000000e+00 : f32
    %26 = vector.broadcast %cst_10 : f32 to vector<1x128xf32>
    %27 = arith.addf %26, %25 : vector<1x128xf32>
    %28 = tpu.reciprocal %27 {approx = true} : vector<1x128xf32> -> vector<1x128xf32>
    %29 = arith.select %18, %22, %28 : vector<1x128xi1>, vector<1x128xf32>
    %30 = vector.extract_strided_slice %29 {offsets = [0, 0], sizes = [1, 32], strides = [1, 1]} : vector<1x128xf32> to vector<1x32xf32>
    %31 = vector.extract_strided_slice %29 {offsets = [0, 32], sizes = [1, 32], strides = [1, 1]} : vector<1x128xf32> to vector<1x32xf32>
    %32 = vector.extract_strided_slice %29 {offsets = [0, 64], sizes = [1, 32], strides = [1, 1]} : vector<1x128xf32> to vector<1x32xf32>
    %33 = vector.extract_strided_slice %29 {offsets = [0, 96], sizes = [1, 32], strides = [1, 1]} : vector<1x128xf32> to vector<1x32xf32>
    %34 = arith.mulf %31, %12 : vector<1x32xf32>
    %35 = arith.mulf %30, %32 : vector<1x32xf32>
    %36 = arith.addf %34, %35 : vector<1x32xf32>
    %37 = math.tanh %36 : vector<1x32xf32>
    %38 = arith.mulf %33, %37 : vector<1x32xf32>
    %cst_11 = arith.constant dense<0.000000e+00> : vector<1x128xf32>
    %39 = tpu.matmul %38, %2, %cst_11 {dimension_numbers = #tpu.dot_dimension_numbers<[1], [0], [0], [1], [0, 0, 1, 1], [], []>} : vector<1x32xf32>, vector<32x128xf32>, vector<1x128xf32> -> vector<1x128xf32>
    %40 = vector.extract_strided_slice %10 {offsets = [1, 0], sizes = [1, 128], strides = [1, 1]} : vector<8x128xf32> to vector<1x128xf32>
    %41 = arith.addf %39, %40 : vector<1x128xf32>
    %42 = math.tanh %41 : vector<1x128xf32>
    %cst_12 = arith.constant 0.000000e+00 : f32
    %43 = vector.broadcast %cst_12 : f32 to vector<1x128xf32>
    %44 = arith.subf %43, %41 : vector<1x128xf32>
    %45 = math.exp %44 : vector<1x128xf32>
    %cst_13 = arith.constant 1.000000e+00 : f32
    %46 = vector.broadcast %cst_13 : f32 to vector<1x128xf32>
    %47 = arith.addf %46, %45 : vector<1x128xf32>
    %48 = tpu.reciprocal %47 {approx = true} : vector<1x128xf32> -> vector<1x128xf32>
    %49 = arith.select %18, %42, %48 : vector<1x128xi1>, vector<1x128xf32>
    %50 = vector.extract_strided_slice %49 {offsets = [0, 0], sizes = [1, 32], strides = [1, 1]} : vector<1x128xf32> to vector<1x32xf32>
    %51 = vector.extract_strided_slice %49 {offsets = [0, 32], sizes = [1, 32], strides = [1, 1]} : vector<1x128xf32> to vector<1x32xf32>
    %52 = vector.extract_strided_slice %49 {offsets = [0, 64], sizes = [1, 32], strides = [1, 1]} : vector<1x128xf32> to vector<1x32xf32>
    %53 = vector.extract_strided_slice %49 {offsets = [0, 96], sizes = [1, 32], strides = [1, 1]} : vector<1x128xf32> to vector<1x32xf32>
    %54 = arith.mulf %51, %36 : vector<1x32xf32>
    %55 = arith.mulf %50, %52 : vector<1x32xf32>
    %56 = arith.addf %54, %55 : vector<1x32xf32>
    %57 = math.tanh %56 : vector<1x32xf32>
    %58 = arith.mulf %53, %57 : vector<1x32xf32>
    %cst_14 = arith.constant dense<0.000000e+00> : vector<1x128xf32>
    %59 = tpu.matmul %58, %2, %cst_14 {dimension_numbers = #tpu.dot_dimension_numbers<[1], [0], [0], [1], [0, 0, 1, 1], [], []>} : vector<1x32xf32>, vector<32x128xf32>, vector<1x128xf32> -> vector<1x128xf32>
    %60 = vector.extract_strided_slice %10 {offsets = [2, 0], sizes = [1, 128], strides = [1, 1]} : vector<8x128xf32> to vector<1x128xf32>
    %61 = arith.addf %59, %60 : vector<1x128xf32>
    %62 = math.tanh %61 : vector<1x128xf32>
    %cst_15 = arith.constant 0.000000e+00 : f32
    %63 = vector.broadcast %cst_15 : f32 to vector<1x128xf32>
    %64 = arith.subf %63, %61 : vector<1x128xf32>
    %65 = math.exp %64 : vector<1x128xf32>
    %cst_16 = arith.constant 1.000000e+00 : f32
    %66 = vector.broadcast %cst_16 : f32 to vector<1x128xf32>
    %67 = arith.addf %66, %65 : vector<1x128xf32>
    %68 = tpu.reciprocal %67 {approx = true} : vector<1x128xf32> -> vector<1x128xf32>
    %69 = arith.select %18, %62, %68 : vector<1x128xi1>, vector<1x128xf32>
    %70 = vector.extract_strided_slice %69 {offsets = [0, 0], sizes = [1, 32], strides = [1, 1]} : vector<1x128xf32> to vector<1x32xf32>
    %71 = vector.extract_strided_slice %69 {offsets = [0, 32], sizes = [1, 32], strides = [1, 1]} : vector<1x128xf32> to vector<1x32xf32>
    %72 = vector.extract_strided_slice %69 {offsets = [0, 64], sizes = [1, 32], strides = [1, 1]} : vector<1x128xf32> to vector<1x32xf32>
    %73 = vector.extract_strided_slice %69 {offsets = [0, 96], sizes = [1, 32], strides = [1, 1]} : vector<1x128xf32> to vector<1x32xf32>
    %74 = arith.mulf %71, %56 : vector<1x32xf32>
    %75 = arith.mulf %70, %72 : vector<1x32xf32>
    %76 = arith.addf %74, %75 : vector<1x32xf32>
    %77 = math.tanh %76 : vector<1x32xf32>
    %78 = arith.mulf %73, %77 : vector<1x32xf32>
    %cst_17 = arith.constant dense<0.000000e+00> : vector<1x128xf32>
    %79 = tpu.matmul %78, %2, %cst_17 {dimension_numbers = #tpu.dot_dimension_numbers<[1], [0], [0], [1], [0, 0, 1, 1], [], []>} : vector<1x32xf32>, vector<32x128xf32>, vector<1x128xf32> -> vector<1x128xf32>
    %80 = vector.extract_strided_slice %10 {offsets = [3, 0], sizes = [1, 128], strides = [1, 1]} : vector<8x128xf32> to vector<1x128xf32>
    %81 = arith.addf %79, %80 : vector<1x128xf32>
    %82 = math.tanh %81 : vector<1x128xf32>
    %cst_18 = arith.constant 0.000000e+00 : f32
    %83 = vector.broadcast %cst_18 : f32 to vector<1x128xf32>
    %84 = arith.subf %83, %81 : vector<1x128xf32>
    %85 = math.exp %84 : vector<1x128xf32>
    %cst_19 = arith.constant 1.000000e+00 : f32
    %86 = vector.broadcast %cst_19 : f32 to vector<1x128xf32>
    %87 = arith.addf %86, %85 : vector<1x128xf32>
    %88 = tpu.reciprocal %87 {approx = true} : vector<1x128xf32> -> vector<1x128xf32>
    %89 = arith.select %18, %82, %88 : vector<1x128xi1>, vector<1x128xf32>
    %90 = vector.extract_strided_slice %89 {offsets = [0, 0], sizes = [1, 32], strides = [1, 1]} : vector<1x128xf32> to vector<1x32xf32>
    %91 = vector.extract_strided_slice %89 {offsets = [0, 32], sizes = [1, 32], strides = [1, 1]} : vector<1x128xf32> to vector<1x32xf32>
    %92 = vector.extract_strided_slice %89 {offsets = [0, 64], sizes = [1, 32], strides = [1, 1]} : vector<1x128xf32> to vector<1x32xf32>
    %93 = vector.extract_strided_slice %89 {offsets = [0, 96], sizes = [1, 32], strides = [1, 1]} : vector<1x128xf32> to vector<1x32xf32>
    %94 = arith.mulf %91, %76 : vector<1x32xf32>
    %95 = arith.mulf %90, %92 : vector<1x32xf32>
    %96 = arith.addf %94, %95 : vector<1x32xf32>
    %97 = math.tanh %96 : vector<1x32xf32>
    %98 = arith.mulf %93, %97 : vector<1x32xf32>
    %cst_20 = arith.constant dense<0.000000e+00> : vector<1x128xf32>
    %99 = tpu.matmul %98, %2, %cst_20 {dimension_numbers = #tpu.dot_dimension_numbers<[1], [0], [0], [1], [0, 0, 1, 1], [], []>} : vector<1x32xf32>, vector<32x128xf32>, vector<1x128xf32> -> vector<1x128xf32>
    %100 = vector.extract_strided_slice %10 {offsets = [4, 0], sizes = [1, 128], strides = [1, 1]} : vector<8x128xf32> to vector<1x128xf32>
    %101 = arith.addf %99, %100 : vector<1x128xf32>
    %102 = math.tanh %101 : vector<1x128xf32>
    %cst_21 = arith.constant 0.000000e+00 : f32
    %103 = vector.broadcast %cst_21 : f32 to vector<1x128xf32>
    %104 = arith.subf %103, %101 : vector<1x128xf32>
    %105 = math.exp %104 : vector<1x128xf32>
    %cst_22 = arith.constant 1.000000e+00 : f32
    %106 = vector.broadcast %cst_22 : f32 to vector<1x128xf32>
    %107 = arith.addf %106, %105 : vector<1x128xf32>
    %108 = tpu.reciprocal %107 {approx = true} : vector<1x128xf32> -> vector<1x128xf32>
    %109 = arith.select %18, %102, %108 : vector<1x128xi1>, vector<1x128xf32>
    %110 = vector.extract_strided_slice %109 {offsets = [0, 0], sizes = [1, 32], strides = [1, 1]} : vector<1x128xf32> to vector<1x32xf32>
    %111 = vector.extract_strided_slice %109 {offsets = [0, 32], sizes = [1, 32], strides = [1, 1]} : vector<1x128xf32> to vector<1x32xf32>
    %112 = vector.extract_strided_slice %109 {offsets = [0, 64], sizes = [1, 32], strides = [1, 1]} : vector<1x128xf32> to vector<1x32xf32>
    %113 = vector.extract_strided_slice %109 {offsets = [0, 96], sizes = [1, 32], strides = [1, 1]} : vector<1x128xf32> to vector<1x32xf32>
    %114 = arith.mulf %111, %96 : vector<1x32xf32>
    %115 = arith.mulf %110, %112 : vector<1x32xf32>
    %116 = arith.addf %114, %115 : vector<1x32xf32>
    %117 = math.tanh %116 : vector<1x32xf32>
    %118 = arith.mulf %113, %117 : vector<1x32xf32>
    %cst_23 = arith.constant dense<0.000000e+00> : vector<1x128xf32>
    %119 = tpu.matmul %118, %2, %cst_23 {dimension_numbers = #tpu.dot_dimension_numbers<[1], [0], [0], [1], [0, 0, 1, 1], [], []>} : vector<1x32xf32>, vector<32x128xf32>, vector<1x128xf32> -> vector<1x128xf32>
    %120 = vector.extract_strided_slice %10 {offsets = [5, 0], sizes = [1, 128], strides = [1, 1]} : vector<8x128xf32> to vector<1x128xf32>
    %121 = arith.addf %119, %120 : vector<1x128xf32>
    %122 = math.tanh %121 : vector<1x128xf32>
    %cst_24 = arith.constant 0.000000e+00 : f32
    %123 = vector.broadcast %cst_24 : f32 to vector<1x128xf32>
    %124 = arith.subf %123, %121 : vector<1x128xf32>
    %125 = math.exp %124 : vector<1x128xf32>
    %cst_25 = arith.constant 1.000000e+00 : f32
    %126 = vector.broadcast %cst_25 : f32 to vector<1x128xf32>
    %127 = arith.addf %126, %125 : vector<1x128xf32>
    %128 = tpu.reciprocal %127 {approx = true} : vector<1x128xf32> -> vector<1x128xf32>
    %129 = arith.select %18, %122, %128 : vector<1x128xi1>, vector<1x128xf32>
    %130 = vector.extract_strided_slice %129 {offsets = [0, 0], sizes = [1, 32], strides = [1, 1]} : vector<1x128xf32> to vector<1x32xf32>
    %131 = vector.extract_strided_slice %129 {offsets = [0, 32], sizes = [1, 32], strides = [1, 1]} : vector<1x128xf32> to vector<1x32xf32>
    %132 = vector.extract_strided_slice %129 {offsets = [0, 64], sizes = [1, 32], strides = [1, 1]} : vector<1x128xf32> to vector<1x32xf32>
    %133 = vector.extract_strided_slice %129 {offsets = [0, 96], sizes = [1, 32], strides = [1, 1]} : vector<1x128xf32> to vector<1x32xf32>
    %134 = arith.mulf %131, %116 : vector<1x32xf32>
    %135 = arith.mulf %130, %132 : vector<1x32xf32>
    %136 = arith.addf %134, %135 : vector<1x32xf32>
    %137 = math.tanh %136 : vector<1x32xf32>
    %138 = arith.mulf %133, %137 : vector<1x32xf32>
    %cst_26 = arith.constant dense<0.000000e+00> : vector<1x128xf32>
    %139 = tpu.matmul %138, %2, %cst_26 {dimension_numbers = #tpu.dot_dimension_numbers<[1], [0], [0], [1], [0, 0, 1, 1], [], []>} : vector<1x32xf32>, vector<32x128xf32>, vector<1x128xf32> -> vector<1x128xf32>
    %140 = vector.extract_strided_slice %10 {offsets = [6, 0], sizes = [1, 128], strides = [1, 1]} : vector<8x128xf32> to vector<1x128xf32>
    %141 = arith.addf %139, %140 : vector<1x128xf32>
    %142 = math.tanh %141 : vector<1x128xf32>
    %cst_27 = arith.constant 0.000000e+00 : f32
    %143 = vector.broadcast %cst_27 : f32 to vector<1x128xf32>
    %144 = arith.subf %143, %141 : vector<1x128xf32>
    %145 = math.exp %144 : vector<1x128xf32>
    %cst_28 = arith.constant 1.000000e+00 : f32
    %146 = vector.broadcast %cst_28 : f32 to vector<1x128xf32>
    %147 = arith.addf %146, %145 : vector<1x128xf32>
    %148 = tpu.reciprocal %147 {approx = true} : vector<1x128xf32> -> vector<1x128xf32>
    %149 = arith.select %18, %142, %148 : vector<1x128xi1>, vector<1x128xf32>
    %150 = vector.extract_strided_slice %149 {offsets = [0, 0], sizes = [1, 32], strides = [1, 1]} : vector<1x128xf32> to vector<1x32xf32>
    %151 = vector.extract_strided_slice %149 {offsets = [0, 32], sizes = [1, 32], strides = [1, 1]} : vector<1x128xf32> to vector<1x32xf32>
    %152 = vector.extract_strided_slice %149 {offsets = [0, 64], sizes = [1, 32], strides = [1, 1]} : vector<1x128xf32> to vector<1x32xf32>
    %153 = vector.extract_strided_slice %149 {offsets = [0, 96], sizes = [1, 32], strides = [1, 1]} : vector<1x128xf32> to vector<1x32xf32>
    %154 = arith.mulf %151, %136 : vector<1x32xf32>
    %155 = arith.mulf %150, %152 : vector<1x32xf32>
    %156 = arith.addf %154, %155 : vector<1x32xf32>
    %157 = math.tanh %156 : vector<1x32xf32>
    %158 = arith.mulf %153, %157 : vector<1x32xf32>
    %cst_29 = arith.constant dense<0.000000e+00> : vector<1x128xf32>
    %159 = tpu.matmul %158, %2, %cst_29 {dimension_numbers = #tpu.dot_dimension_numbers<[1], [0], [0], [1], [0, 0, 1, 1], [], []>} : vector<1x32xf32>, vector<32x128xf32>, vector<1x128xf32> -> vector<1x128xf32>
    %160 = vector.extract_strided_slice %10 {offsets = [7, 0], sizes = [1, 128], strides = [1, 1]} : vector<8x128xf32> to vector<1x128xf32>
    %161 = arith.addf %159, %160 : vector<1x128xf32>
    %162 = math.tanh %161 : vector<1x128xf32>
    %cst_30 = arith.constant 0.000000e+00 : f32
    %163 = vector.broadcast %cst_30 : f32 to vector<1x128xf32>
    %164 = arith.subf %163, %161 : vector<1x128xf32>
    %165 = math.exp %164 : vector<1x128xf32>
    %cst_31 = arith.constant 1.000000e+00 : f32
    %166 = vector.broadcast %cst_31 : f32 to vector<1x128xf32>
    %167 = arith.addf %166, %165 : vector<1x128xf32>
    %168 = tpu.reciprocal %167 {approx = true} : vector<1x128xf32> -> vector<1x128xf32>
    %169 = arith.select %18, %162, %168 : vector<1x128xi1>, vector<1x128xf32>
    %170 = vector.extract_strided_slice %169 {offsets = [0, 0], sizes = [1, 32], strides = [1, 1]} : vector<1x128xf32> to vector<1x32xf32>
    %171 = vector.extract_strided_slice %169 {offsets = [0, 32], sizes = [1, 32], strides = [1, 1]} : vector<1x128xf32> to vector<1x32xf32>
    %172 = vector.extract_strided_slice %169 {offsets = [0, 64], sizes = [1, 32], strides = [1, 1]} : vector<1x128xf32> to vector<1x32xf32>
    %173 = vector.extract_strided_slice %169 {offsets = [0, 96], sizes = [1, 32], strides = [1, 1]} : vector<1x128xf32> to vector<1x32xf32>
    %174 = arith.mulf %171, %156 : vector<1x32xf32>
    %175 = arith.mulf %170, %172 : vector<1x32xf32>
    %176 = arith.addf %174, %175 : vector<1x32xf32>
    %177 = math.tanh %176 : vector<1x32xf32>
    %178 = arith.mulf %173, %177 : vector<1x32xf32>
    %cst_32 = arith.constant dense<0.000000e+00> : vector<1x2xf32>
    %179 = tpu.matmul %178, %5, %cst_32 {dimension_numbers = #tpu.dot_dimension_numbers<[1], [0], [0], [1], [0, 0, 1, 1], [], []>} : vector<1x32xf32>, vector<32x2xf32>, vector<1x2xf32> -> vector<1x2xf32>
    %180 = arith.addf %179, %6 : vector<1x2xf32>
    %c0_33 = arith.constant 0 : index
    %c0_34 = arith.constant 0 : index
    %181 = vector.load %arg4[%c0_33, %c0_34] : memref<1x2xf32, #tpu.memory_space<vmem>>, vector<1x2xf32>
    tpu.vector_store %arg4[%c0_33, %c0_34], %180 {strides = array<i32>} : memref<1x2xf32, #tpu.memory_space<vmem>>, vector<1x2xf32>,
    return
  }
}

</mosaic_0001>

<llo_original>
// kernel: lstm_classifier_forward.1
$region0: #{lstm_classifier_forward.1}
  #allocation0 [shape = 'u32[]', space=smem, size = 0x4, offset = 0x4, fixed_abs, tag = 'smem constant byte address 0x4 - core index']
  #allocation1 [shape = 'u32[72,128]{1,0:T(1,128)}', space=vmem, size = 0x9000, scoped, tag = 'internal scratch']
  %s0 = inlined_call_operand.vmem [shape: f32[8,16], index: 0, kind: input, shape index: {}]
  %s1 = inlined_call_operand.vmem [shape: f32[2,32], index: 1, kind: input, shape index: {}]
  %s2 = inlined_call_operand.hbm [shape: f32[49,128], index: 2, kind: input, shape index: {}]
  %s3 = inlined_call_operand.vmem [shape: f32[33,2], index: 3, kind: input, shape index: {}]
  %s4 = inlined_call_operand.hbm [shape: f32[1,2], index: 4, kind: output, shape index: {}]
  %s5 = sld [smem:[#allocation0]]
  $region30: #{lstm_classifier_forward.1} parent=0
    _
  %s7 = ssub.s32 1, %s5
  %s8 = scalar_select 0, %s7, %s5
  $region1: #{lstm_classifier_forward.1} parent=0
    #allocation2 [shape = 'u8[28672]{0}', space=vmem, size = 0x7000, scoped, tag = 'input window, operand 2, single buffered']
    #allocation3 [shape = 's32[1]{0}', space=sflag, size = 0x4, scoped, tag = 'scoped memory for lstm_classifier_forward.1']
    #allocation4 [shape = 's32[1]{0}', space=sflag, size = 0x4, scoped, tag = 'scoped memory for lstm_classifier_forward.1']
    #allocation5 [shape = 'u8[512]{0}', space=vmem, size = 0x400, scoped, tag = 'output window, operand 0, single buffered']
    %9 = vsyncpa [#allocation3], 0
    %10 = vsyncpa [#allocation4], 0
    // Predicated region
    $region2: #{lstm_classifier_forward.1} parent=1 // pred_check
      _
    $region3: #{lstm_classifier_forward.1} parent=1 // pred_check_branch
      %12 = sbr.rel (0) target = $region5
    $region4: #{lstm_classifier_forward.1} parent=1 // pred_region
      _
    $region5: #{lstm_classifier_forward.1} parent=1 // pred_fallthru
      _
    // Predicated region
    $region6: #{lstm_classifier_forward.1} parent=1 // pred_check
      _
    $region7: #{lstm_classifier_forward.1} parent=1 // pred_check_branch
      %14 = sbr.rel (0) target = $region9
    $region8: #{lstm_classifier_forward.1} parent=1 // pred_region
      _
    $region9: #{lstm_classifier_forward.1} parent=1 // pred_fallthru
      _
    // Predicated region
    $region10: #{lstm_classifier_forward.1} parent=1 // pred_check
      _
    $region11: #{lstm_classifier_forward.1} parent=1 // pred_check_branch
      %16 = sbr.rel (0) target = $region13
    $region12: #{lstm_classifier_forward.1} parent=1 // pred_region
      %18 = vsyncadd [#allocation3], 0
      %s19 = sshll.u32 %s2, 4
      %s20 = int_to_ptr.hbm [resolvable:$true] %s19
      %s21 = sshll.u32 [#allocation2], 4
      %s22 = int_to_ptr.vmem [resolvable:$true] %s21
      %27 = dma.hbm_to_vmem [thread:$0]  %s20, 896, %s22, [#allocation3], 128, 128, 8
    $region13: #{lstm_classifier_forward.1} parent=1 // pred_fallthru
      _
    // Predicated region
    $region14: #{lstm_classifier_forward.1} parent=1 // pred_check
      _
    $region15: #{lstm_classifier_forward.1} parent=1 // pred_check_branch
      %29 = sbr.rel (0) target = $region17
    $region16: #{lstm_classifier_forward.1} parent=1 // pred_region
      _
    $region17: #{lstm_classifier_forward.1} parent=1 // pred_fallthru
      _
    // Predicated region
    $region18: #{lstm_classifier_forward.1} parent=1 // pred_check
      _
    $region19: #{lstm_classifier_forward.1} parent=1 // pred_check_branch
      %31 = sbr.rel (0) target = $region21
    $region20: #{lstm_classifier_forward.1} parent=1 // pred_region
      %33 = dma.done [#allocation3], 896
    $region21: #{lstm_classifier_forward.1} parent=1 // pred_fallthru
      _
    %v34 = vld [vmem:[#allocation2] sm:$0xff]
    %v35 = vld [vmem:[#allocation2 + $0x8] sm:$0xff]
    %v36 = vld [vmem:[#allocation2 + $0x10] sm:$0xff]
    %v37 = vld [vmem:[#allocation2 + $0x18] sm:$0xff]
    %v38 = vld [vmem:[#allocation2 + $0x20] sm:$0xff]
    %v39 = vld [vmem:[#allocation2 + $0x28] sm:$0xff]
    %v40 = vld [vmem:[#allocation2 + $0x30] sm:$0x1]
    %v41 = vld [vmem:[%s3] sm:$0xff]
    %v42 = vld [vmem:[%s3 + $0x8] sm:$0xff]
    %v43 = vld [vmem:[%s3 + $0x10] sm:$0xff]
    %v44 = vld [vmem:[%s3 + $0x18] sm:$0xff]
    %v45 = vld [vmem:[%s3 + $0x20] sm:$0x1]
    %v46 = vld [vmem:[%s0] sm:$0xff]
    %v47 = vperm.slane %v40, 0
    %vm48 = vcmask 130048
    %v50 = vsel %vm48, %v46, 0
    %52 = vmatpush.msra.mxu0 0.0
    %53 = vmatpush.msra.mxu0 0.0
    %54 = vmatpush.msra.mxu0 0.0
    %55 = vmatpush.msra.mxu0 0.0
    %56 = vmatpush.msra.mxu0 0.0
    %57 = vmatpush.msra.mxu0 0.0
    %58 = vmatpush.msra.mxu0 0.0
    %59 = vmatpush.msra.mxu0 0.0
    %60 = vmatpush.msra.mxu0 0.0
    %61 = vmatpush.msra.mxu0 0.0
    %62 = vmatpush.msra.mxu0 0.0
    %63 = vmatpush.msra.mxu0 0.0
    %64 = vmatpush.msra.mxu0 0.0
    %65 = vmatpush.msra.mxu0 0.0
    %66 = vmatpush.msra.mxu0 %v35
    %67 = vmatpush.msra.mxu0 %v34
    %68 = vmatmul.f32.gmra.mxu0 %v50
    %v69 = vpop.f32.mrf.mxu0
    %v70 = vadd.f32 %v47, %v69
    %71 = vdwg.mxu0
    %v72 = vld [vmem:[%s1] sm:$0x1]
    %v73 = vld [vmem:[%s1 + $0x1] sm:$0x1]
    %v74 = vlaneseq
    %v75 = vand.u32 %v74, 127
    %vm76 = vcmp.ge.s32.totalorder %v75, 64
    %vm77 = vcmp.lt.s32.totalorder %v75, 96
    %vm78 = vmand %vm76, %vm77
    %vm79 = vcmask 261120
    %v81 = vsel %vm79, %v72, 0
    %83 = vmatpush.msra.mxu0 0.0
    %84 = vmatpush.msra.mxu0 0.0
    %85 = vmatpush.msra.mxu0 0.0
    %86 = vmatpush.msra.mxu0 0.0
    %87 = vmatpush.msra.mxu0 0.0
    %88 = vmatpush.msra.mxu0 0.0
    %89 = vmatpush.msra.mxu0 0.0
    %90 = vmatpush.msra.mxu0 0.0
    %91 = vmatpush.msra.mxu0 0.0
    %92 = vmatpush.msra.mxu0 0.0
    %93 = vmatpush.msra.mxu0 0.0
    %94 = vmatpush.msra.mxu0 0.0
    %95 = vmatpush.msra.mxu0 %v39
    %96 = vmatpush.msra.mxu0 %v38
    %97 = vmatpush.msra.mxu0 %v37
    %98 = vmatpush.msra.mxu0 %v36
    %99 = vmatmul.f32.gmra.mxu0 %v81
    %v100 = vpop.f32.mrf.mxu0
    %v101 = vadd.f32 %v70, %v100
    %102 = vdwg.mxu0
    %v103 = vtanh.pop %v101
    %v104 = vsub.f32 0.0, %v101
    %v105 = vmul.f32 %v104, 1.442695
    %v106 = vpow.pop %v105
    %v107 = vadd.f32 %v106, 1.0
    %v108 = vrcp.pop %v107
    %v109 = vsel %vm78, %v103, %v108
    %111 = vrot.lane.b32.xlu0 %v73, 32
    %v112 = vpop.permute.xlu0 %111
    %v114 = vmul.f32 %v109, %v112
    %116 = vrot.lane.b32.xlu0 %v109, 64
    %v117 = vpop.permute.xlu0 %116
    %v119 = vmul.f32 %v109, %v117
    %121 = vrot.lane.b32.xlu0 %v119, 32
    %v122 = vpop.permute.xlu0 %121
    %v124 = vadd.f32 %v114, %v122
    %v125 = vtanh.pop %v124
    %127 = vrot.lane.b32.xlu0 %v125, 64
    %v128 = vpop.permute.xlu0 %127
    %v130 = vmul.f32 %v109, %v128
    %132 = vrot.lane.b32.xlu0 %v130, 32
    %v133 = vpop.permute.xlu0 %132
    %v135 = vrot.slane %v70, 1
    %v137 = vsel %vm79, %v133, 0
    %139 = vmatpush.msra.mxu0 0.0
    %140 = vmatpush.msra.mxu0 0.0
    %141 = vmatpush.msra.mxu0 0.0
    %142 = vmatpush.msra.mxu0 0.0
    %143 = vmatpush.msra.mxu0 0.0
    %144 = vmatpush.msra.mxu0 0.0
    %145 = vmatpush.msra.mxu0 0.0
    %146 = vmatpush.msra.mxu0 0.0
    %147 = vmatpush.msra.mxu0 0.0
    %148 = vmatpush.msra.mxu0 0.0
    %149 = vmatpush.msra.mxu0 0.0
    %150 = vmatpush.msra.mxu0 0.0
    %151 = vmatpush.msra.mxu0 %v39
    %152 = vmatpush.msra.mxu0 %v38
    %153 = vmatpush.msra.mxu0 %v37
    %154 = vmatpush.msra.mxu0 %v36
    %155 = vmatmul.f32.gmra.mxu0 %v137
    %v156 = vpop.f32.mrf.mxu0
    %v157 = vadd.f32 %v135, %v156
    %158 = vdwg.mxu0
    %v159 = vtanh.pop %v157
    %v160 = vsub.f32 0.0, %v157
    %v161 = vmul.f32 %v160, 1.442695
    %v162 = vpow.pop %v161
    %v163 = vadd.f32 %v162, 1.0
    %v164 = vrcp.pop %v163
    %v165 = vsel %vm78, %v159, %v164
    %v166 = vmul.f32 %v165, %v124
    %168 = vrot.lane.b32.xlu0 %v165, 64
    %v169 = vpop.permute.xlu0 %168
    %v171 = vmul.f32 %v165, %v169
    %173 = vrot.lane.b32.xlu0 %v171, 32
    %v174 = vpop.permute.xlu0 %173
    %v176 = vadd.f32 %v166, %v174
    %v177 = vtanh.pop %v176
    %179 = vrot.lane.b32.xlu0 %v177, 64
    %v180 = vpop.permute.xlu0 %179
    %v182 = vmul.f32 %v165, %v180
    %184 = vrot.lane.b32.xlu0 %v182, 32
    %v185 = vpop.permute.xlu0 %184
    %v186 = vrot.slane %v70, 2
    %v188 = vsel %vm79, %v185, 0
    %190 = vmatpush.msra.mxu0 0.0
    %191 = vmatpush.msra.mxu0 0.0
    %192 = vmatpush.msra.mxu0 0.0
    %193 = vmatpush.msra.mxu0 0.0
    %194 = vmatpush.msra.mxu0 0.0
    %195 = vmatpush.msra.mxu0 0.0
    %196 = vmatpush.msra.mxu0 0.0
    %197 = vmatpush.msra.mxu0 0.0
    %198 = vmatpush.msra.mxu0 0.0
    %199 = vmatpush.msra.mxu0 0.0
    %200 = vmatpush.msra.mxu0 0.0
    %201 = vmatpush.msra.mxu0 0.0
    %202 = vmatpush.msra.mxu0 %v39
    %203 = vmatpush.msra.mxu0 %v38
    %204 = vmatpush.msra.mxu0 %v37
    %205 = vmatpush.msra.mxu0 %v36
    %206 = vmatmul.f32.gmra.mxu0 %v188
    %v207 = vpop.f32.mrf.mxu0
    %v208 = vadd.f32 %v186, %v207
    %209 = vdwg.mxu0
    %v210 = vtanh.pop %v208
    %v211 = vsub.f32 0.0, %v208
    %v212 = vmul.f32 %v211, 1.442695
    %v213 = vpow.pop %v212
    %v214 = vadd.f32 %v213, 1.0
    %v215 = vrcp.pop %v214
    %v216 = vsel %vm78, %v210, %v215
    %v217 = vmul.f32 %v216, %v176
    %219 = vrot.lane.b32.xlu0 %v216, 64
    %v220 = vpop.permute.xlu0 %219
    %v222 = vmul.f32 %v216, %v220
    %224 = vrot.lane.b32.xlu0 %v222, 32
    %v225 = vpop.permute.xlu0 %224
    %v227 = vadd.f32 %v217, %v225
    %v228 = vtanh.pop %v227
    %230 = vrot.lane.b32.xlu0 %v228, 64
    %v231 = vpop.permute.xlu0 %230
    %v233 = vmul.f32 %v216, %v231
    %235 = vrot.lane.b32.xlu0 %v233, 32
    %v236 = vpop.permute.xlu0 %235
    %v237 = vrot.slane %v70, 3
    %v239 = vsel %vm79, %v236, 0
    %241 = vmatpush.msra.mxu0 0.0
    %242 = vmatpush.msra.mxu0 0.0
    %243 = vmatpush.msra.mxu0 0.0
    %244 = vmatpush.msra.mxu0 0.0
    %245 = vmatpush.msra.mxu0 0.0
    %246 = vmatpush.msra.mxu0 0.0
    %247 = vmatpush.msra.mxu0 0.0
    %248 = vmatpush.msra.mxu0 0.0
    %249 = vmatpush.msra.mxu0 0.0
    %250 = vmatpush.msra.mxu0 0.0
    %251 = vmatpush.msra.mxu0 0.0
    %252 = vmatpush.msra.mxu0 0.0
    %253 = vmatpush.msra.mxu0 %v39
    %254 = vmatpush.msra.mxu0 %v38
    %255 = vmatpush.msra.mxu0 %v37
    %256 = vmatpush.msra.mxu0 %v36
    %257 = vmatmul.f32.gmra.mxu0 %v239
    %v258 = vpop.f32.mrf.mxu0
    %v259 = vadd.f32 %v237, %v258
    %260 = vdwg.mxu0
    %v261 = vtanh.pop %v259
    %v262 = vsub.f32 0.0, %v259
    %v263 = vmul.f32 %v262, 1.442695
    %v264 = vpow.pop %v263
    %v265 = vadd.f32 %v264, 1.0
    %v266 = vrcp.pop %v265
    %v267 = vsel %vm78, %v261, %v266
    %v268 = vmul.f32 %v267, %v227
    %270 = vrot.lane.b32.xlu0 %v267, 64
    %v271 = vpop.permute.xlu0 %270
    %v273 = vmul.f32 %v267, %v271
    %275 = vrot.lane.b32.xlu0 %v273, 32
    %v276 = vpop.permute.xlu0 %275
    %v278 = vadd.f32 %v268, %v276
    %v279 = vtanh.pop %v278
    %281 = vrot.lane.b32.xlu0 %v279, 64
    %v282 = vpop.permute.xlu0 %281
    %v284 = vmul.f32 %v267, %v282
    %286 = vrot.lane.b32.xlu0 %v284, 32
    %v287 = vpop.permute.xlu0 %286
    %v288 = vrot.slane %v70, 4
    %v290 = vsel %vm79, %v287, 0
    %292 = vmatpush.msra.mxu0 0.0
    %293 = vmatpush.msra.mxu0 0.0
    %294 = vmatpush.msra.mxu0 0.0
    %295 = vmatpush.msra.mxu0 0.0
    %296 = vmatpush.msra.mxu0 0.0
    %297 = vmatpush.msra.mxu0 0.0
    %298 = vmatpush.msra.mxu0 0.0
    %299 = vmatpush.msra.mxu0 0.0
    %300 = vmatpush.msra.mxu0 0.0
    %301 = vmatpush.msra.mxu0 0.0
    %302 = vmatpush.msra.mxu0 0.0
    %303 = vmatpush.msra.mxu0 0.0
    %304 = vmatpush.msra.mxu0 %v39
    %305 = vmatpush.msra.mxu0 %v38
    %306 = vmatpush.msra.mxu0 %v37
    %307 = vmatpush.msra.mxu0 %v36
    %308 = vmatmul.f32.gmra.mxu0 %v290
    %v309 = vpop.f32.mrf.mxu0
    %v310 = vadd.f32 %v288, %v309
    %311 = vdwg.mxu0
    %v312 = vtanh.pop %v310
    %v313 = vsub.f32 0.0, %v310
    %v314 = vmul.f32 %v313, 1.442695
    %v315 = vpow.pop %v314
    %v316 = vadd.f32 %v315, 1.0
    %v317 = vrcp.pop %v316
    %v318 = vsel %vm78, %v312, %v317
    %v319 = vmul.f32 %v318, %v278
    %321 = vrot.lane.b32.xlu0 %v318, 64
    %v322 = vpop.permute.xlu0 %321
    %v324 = vmul.f32 %v318, %v322
    %326 = vrot.lane.b32.xlu0 %v324, 32
    %v327 = vpop.permute.xlu0 %326
    %v329 = vadd.f32 %v319, %v327
    %v330 = vtanh.pop %v329
    %332 = vrot.lane.b32.xlu0 %v330, 64
    %v333 = vpop.permute.xlu0 %332
    %v335 = vmul.f32 %v318, %v333
    %337 = vrot.lane.b32.xlu0 %v335, 32
    %v338 = vpop.permute.xlu0 %337
    %v339 = vrot.slane %v70, 5
    %v341 = vsel %vm79, %v338, 0
    %343 = vmatpush.msra.mxu0 0.0
    %344 = vmatpush.msra.mxu0 0.0
    %345 = vmatpush.msra.mxu0 0.0
    %346 = vmatpush.msra.mxu0 0.0
    %347 = vmatpush.msra.mxu0 0.0
    %348 = vmatpush.msra.mxu0 0.0
    %349 = vmatpush.msra.mxu0 0.0
    %350 = vmatpush.msra.mxu0 0.0
    %351 = vmatpush.msra.mxu0 0.0
    %352 = vmatpush.msra.mxu0 0.0
    %353 = vmatpush.msra.mxu0 0.0
    %354 = vmatpush.msra.mxu0 0.0
    %355 = vmatpush.msra.mxu0 %v39
    %356 = vmatpush.msra.mxu0 %v38
    %357 = vmatpush.msra.mxu0 %v37
    %358 = vmatpush.msra.mxu0 %v36
    %359 = vmatmul.f32.gmra.mxu0 %v341
    %v360 = vpop.f32.mrf.mxu0
    %v361 = vadd.f32 %v339, %v360
    %362 = vdwg.mxu0
    %v363 = vtanh.pop %v361
    %v364 = vsub.f32 0.0, %v361
    %v365 = vmul.f32 %v364, 1.442695
    %v366 = vpow.pop %v365
    %v367 = vadd.f32 %v366, 1.0
    %v368 = vrcp.pop %v367
    %v369 = vsel %vm78, %v363, %v368
    %v370 = vmul.f32 %v369, %v329
    %372 = vrot.lane.b32.xlu0 %v369, 64
    %v373 = vpop.permute.xlu0 %372
    %v375 = vmul.f32 %v369, %v373
    %377 = vrot.lane.b32.xlu0 %v375, 32
    %v378 = vpop.permute.xlu0 %377
    %v380 = vadd.f32 %v370, %v378
    %v381 = vtanh.pop %v380
    %383 = vrot.lane.b32.xlu0 %v381, 64
    %v384 = vpop.permute.xlu0 %383
    %v386 = vmul.f32 %v369, %v384
    %388 = vrot.lane.b32.xlu0 %v386, 32
    %v389 = vpop.permute.xlu0 %388
    %v390 = vrot.slane %v70, 6
    %v392 = vsel %vm79, %v389, 0
    %394 = vmatpush.msra.mxu0 0.0
    %395 = vmatpush.msra.mxu0 0.0
    %396 = vmatpush.msra.mxu0 0.0
    %397 = vmatpush.msra.mxu0 0.0
    %398 = vmatpush.msra.mxu0 0.0
    %399 = vmatpush.msra.mxu0 0.0
    %400 = vmatpush.msra.mxu0 0.0
    %401 = vmatpush.msra.mxu0 0.0
    %402 = vmatpush.msra.mxu0 0.0
    %403 = vmatpush.msra.mxu0 0.0
    %404 = vmatpush.msra.mxu0 0.0
    %405 = vmatpush.msra.mxu0 0.0
    %406 = vmatpush.msra.mxu0 %v39
    %407 = vmatpush.msra.mxu0 %v38
    %408 = vmatpush.msra.mxu0 %v37
    %409 = vmatpush.msra.mxu0 %v36
    %410 = vmatmul.f32.gmra.mxu0 %v392
    %v411 = vpop.f32.mrf.mxu0
    %v412 = vadd.f32 %v390, %v411
    %413 = vdwg.mxu0
    %v414 = vtanh.pop %v412
    %v415 = vsub.f32 0.0, %v412
    %v416 = vmul.f32 %v415, 1.442695
    %v417 = vpow.pop %v416
    %v418 = vadd.f32 %v417, 1.0
    %v419 = vrcp.pop %v418
    %v420 = vsel %vm78, %v414, %v419
    %v421 = vmul.f32 %v420, %v380
    %423 = vrot.lane.b32.xlu0 %v420, 64
    %v424 = vpop.permute.xlu0 %423
    %v426 = vmul.f32 %v420, %v424
    %428 = vrot.lane.b32.xlu0 %v426, 32
    %v429 = vpop.permute.xlu0 %428
    %v431 = vadd.f32 %v421, %v429
    %v432 = vtanh.pop %v431
    %434 = vrot.lane.b32.xlu0 %v432, 64
    %v435 = vpop.permute.xlu0 %434
    %v437 = vmul.f32 %v420, %v435
    %439 = vrot.lane.b32.xlu0 %v437, 32
    %v440 = vpop.permute.xlu0 %439
    %v441 = vrot.slane %v70, 7
    %v443 = vsel %vm79, %v440, 0
    %445 = vmatpush.msra.mxu0 0.0
    %446 = vmatpush.msra.mxu0 0.0
    %447 = vmatpush.msra.mxu0 0.0
    %448 = vmatpush.msra.mxu0 0.0
    %449 = vmatpush.msra.mxu0 0.0
    %450 = vmatpush.msra.mxu0 0.0
    %451 = vmatpush.msra.mxu0 0.0
    %452 = vmatpush.msra.mxu0 0.0
    %453 = vmatpush.msra.mxu0 0.0
    %454 = vmatpush.msra.mxu0 0.0
    %455 = vmatpush.msra.mxu0 0.0
    %456 = vmatpush.msra.mxu0 0.0
    %457 = vmatpush.msra.mxu0 %v39
    %458 = vmatpush.msra.mxu0 %v38
    %459 = vmatpush.msra.mxu0 %v37
    %460 = vmatpush.msra.mxu0 %v36
    %461 = vmatmul.f32.gmra.mxu0 %v443
    %v462 = vpop.f32.mrf.mxu0
    %v463 = vadd.f32 %v441, %v462
    %464 = vdwg.mxu0
    %v465 = vtanh.pop %v463
    %v466 = vsub.f32 0.0, %v463
    %v467 = vmul.f32 %v466, 1.442695
    %v468 = vpow.pop %v467
    %v469 = vadd.f32 %v468, 1.0
    %v470 = vrcp.pop %v469
    %v471 = vsel %vm78, %v465, %v470
    %v472 = vmul.f32 %v471, %v431
    %474 = vrot.lane.b32.xlu0 %v471, 64
    %v475 = vpop.permute.xlu0 %474
    %v477 = vmul.f32 %v471, %v475
    %479 = vrot.lane.b32.xlu0 %v477, 32
    %v480 = vpop.permute.xlu0 %479
    %v482 = vadd.f32 %v472, %v480
    %v483 = vtanh.pop %v482
    %485 = vrot.lane.b32.xlu0 %v483, 64
    %v486 = vpop.permute.xlu0 %485
    %v488 = vmul.f32 %v471, %v486
    %490 = vrot.lane.b32.xlu0 %v488, 32
    %v491 = vpop.permute.xlu0 %490
    %v492 = vsel %vm79, %v491, 0
    %494 = vmatpush.msra.mxu0 0.0
    %495 = vmatpush.msra.mxu0 0.0
    %496 = vmatpush.msra.mxu0 0.0
    %497 = vmatpush.msra.mxu0 0.0
    %498 = vmatpush.msra.mxu0 0.0
    %499 = vmatpush.msra.mxu0 0.0
    %500 = vmatpush.msra.mxu0 0.0
    %501 = vmatpush.msra.mxu0 0.0
    %502 = vmatpush.msra.mxu0 0.0
    %503 = vmatpush.msra.mxu0 0.0
    %504 = vmatpush.msra.mxu0 0.0
    %505 = vmatpush.msra.mxu0 0.0
    %506 = vmatpush.msra.mxu0 %v44
    %507 = vmatpush.msra.mxu0 %v43
    %508 = vmatpush.msra.mxu0 %v42
    %509 = vmatpush.msra.mxu0 %v41
    %510 = vmatmul.f32.gmra.mxu0 %v492
    %v511 = vpop.f32.mrf.mxu0
    %v512 = vadd.f32 %v45, %v511
    %513 = vdwg.mxu0
    %vm514 = vcmask 8192
    %515 = vst.msk [vmem:[#allocation5] sm:$0x1] %vm514, %v512
    // Predicated region
    $region22: #{lstm_classifier_forward.1} parent=1 // pred_check
      _
    $region23: #{lstm_classifier_forward.1} parent=1 // pred_check_branch
      %517 = sbr.rel (0) target = $region25
    $region24: #{lstm_classifier_forward.1} parent=1 // pred_region
      %519 = vsyncadd [#allocation4], 0
      %s521 = sshll.u32 [#allocation5], 4
      %s522 = int_to_ptr.vmem [resolvable:$true] %s521
      %s523 = sshll.u32 %s4, 4
      %s524 = int_to_ptr.hbm [resolvable:$true] %s523
      %526 = dma.vmem_to_hbm [thread:$0]  %s522, 16, %s524, [#allocation4]
    $region25: #{lstm_classifier_forward.1} parent=1 // pred_fallthru
      _
    // Predicated region
    $region26: #{lstm_classifier_forward.1} parent=1 // pred_check
      _
    $region27: #{lstm_classifier_forward.1} parent=1 // pred_check_branch
      %528 = sbr.rel (0) target = $region29
    $region28: #{lstm_classifier_forward.1} parent=1 // pred_region
      %530 = dma.done [#allocation4], 16
    $region29: #{lstm_classifier_forward.1} parent=1 // pred_fallthru
      _
    %531 = vsyncpa [#allocation3], 1
    %532 = vsyncpa [#allocation4], 1

</llo_original>
